<compile_context>
chip_gen: v5e
topology: v5e:2x2
jax: 0.10.0
libtpu: 0.0.40
codegen_flags: <defaults>
</compile_context>

<pallas_src>
import functools

import jax
import jax.numpy as jnp
from jax.experimental import pallas as pl
from jax.experimental.pallas import tpu as pltpu

EPS = 1e-5  # nn.BatchNorm2d default eps


# ----------------------------- kernels ------------------------------------


def _stats_kernel(x_ref, sum_ref, sq_ref):
    """Lane-wise per-row partial sum / sum-of-squares.

    Block layouts (2-D (N*C, H*W) view of the input, H*W on lanes):
      x_ref   : (r_tile, hw_tile)
      sum_ref : (r_tile, lw)   lane-wise accumulator, lw = min(128, hw_tile)
      sq_ref  : (r_tile, lw)
    Grid: (row_blocks [parallel], hw_blocks [arbitrary / reduction]).

    No cross-lane (XLU) work happens per grid step; the final 128-lane reduce
    is done once in the wrapper on the tiny accumulator arrays.
    """
    @pl.when(pl.program_id(1) == 0)
    def _():
        sum_ref[...] = jnp.zeros_like(sum_ref)
        sq_ref[...] = jnp.zeros_like(sq_ref)

    hw_tile = x_ref.shape[1]
    lw = sum_ref.shape[1]
    n_full = hw_tile // lw
    rem = hw_tile - n_full * lw

    def lane_block(k):
        # vreg-aligned static lane slice -> cheap (no cross-lane movement).
        return x_ref[:, k * lw:(k + 1) * lw].astype(jnp.float32)

    # Combine pairs of lane blocks in registers before hitting the VMEM
    # accumulators (halves accumulator read-modify-write traffic).
    k = 0
    while k + 1 < n_full:
        b0, b1 = lane_block(k), lane_block(k + 1)
        sum_ref[...] += b0 + b1
        sq_ref[...] += b0 * b0 + b1 * b1
        k += 2
    if k < n_full:
        b0 = lane_block(k)
        sum_ref[...] += b0
        sq_ref[...] += b0 * b0
    if rem:
        # Only for a full-extent hw_tile that is not a multiple of 128; one
        # masked partial-lane accumulate per grid step.
        tail = x_ref[:, n_full * lw:].astype(jnp.float32)
        sum_ref[:, :rem] += tail
        sq_ref[:, :rem] += tail * tail


def _make_norm_kernel(apply_relu: bool):
    def _norm_kernel(x_ref, scale_ref, shift_ref, o_ref):
        # scale/shift are (r_tile, 1): per-row (= per-channel) affine,
        # broadcast along lanes.  Pure FMA (+ max) hot path.
        y = x_ref[...].astype(jnp.float32) * scale_ref[...] + shift_ref[...]
        if apply_relu:
            y = jnp.maximum(y, 0.0)
        o_ref[...] = y.astype(o_ref.dtype)
    return _norm_kernel


# --------------------------- tile selection --------------------------------


def _vmem_capacity_bytes() -> int:
    try:
        cap = getattr(pltpu.get_tpu_info(), "vmem_capacity_bytes", None)
        if cap:
            return int(cap)
    except Exception:
        pass
    try:
        # Platform-keyed fallback: v5e/v6e have 128 MiB VMEM, v7x has 64 MiB.
        kind = jax.devices()[0].device_kind.lower()
        if "v5" in kind or "v6" in kind:
            return 128 * 1024 * 1024
    except Exception:
        pass
    return 64 * 1024 * 1024


def _largest_aligned_divisor(n: int, unit: int, cap: int) -> int:
    """Largest divisor of n that is a multiple of `unit` and <= cap; 0 if none."""
    d = (min(cap, n) // unit) * unit
    while d >= unit:
        if n % d == 0:
            return d
        d -= unit
    return 0


def _choose_tile(extent: int, unit: int, cap: int):
    """Return (tile, padded_extent): tile divides padded_extent, is a multiple
    of `unit` or equal to the (padded) full extent, and never exceeds the
    budget-derived cap (so no block can overflow VMEM)."""
    cap = max(cap, unit)
    if extent <= cap:
        return extent, extent            # full extent: always a legal block dim
    d = _largest_aligned_divisor(extent, unit, cap)
    if d:
        return d, extent
    # Awkward extent: pad to a multiple of `unit` instead of blowing the budget.
    padded = ((extent + unit - 1) // unit) * unit
    d = _largest_aligned_divisor(padded, unit, cap)
    return max(d, unit), padded


def _plan_tiles(R: int, HW: int, itemsize: int):
    vmem_cap = _vmem_capacity_bytes()
    budget = vmem_cap // 2  # leave half of VMEM as headroom
    # Live bytes per block element in pass 2 (the heavier pass): 2x double-
    # buffered input + 2x double-buffered output (input dtype) + ~2 f32
    # elements of cast/FMA temporaries.
    live_per_elem = 4 * itemsize + 8
    cap_elems = max(budget // live_per_elem, 8 * 128)
    # Keep >= ~8 grid steps on large tensors so the DMA pipeline and the
    # second TensorCore (v7x) have work; irrelevant for tiny tensors.
    cap_elems = min(cap_elems, max((R * HW) // 8, 8 * 128))

    r_unit = R if R < 8 else 8
    # Maximize hw_tile first: it is the contiguous HBM run length of every DMA
    # and the lane-density lever for pass-2 stores.
    hw_tile, hw_pad = _choose_tile(HW, 128, max(cap_elems // r_unit, 128))
    r_cap = max(cap_elems // hw_tile, r_unit)
    if R >= 16:
        # Leave >= 2 row blocks so pass 1 can shard across both v7x TCs.
        r_cap = min(r_cap, max(((R // 2) // 8) * 8, 8))
    if R < 8:
        r_tile, r_pad = R, R
    else:
        r_tile, r_pad = _choose_tile(R, 8, r_cap)

    lw = min(128, hw_tile)
    block_elems = r_tile * hw_tile
    live = block_elems * live_per_elem + 4 * r_tile * lw * 4  # + accumulators
    vmem_limit = int(min(vmem_cap,
                         max(32 * 1024 * 1024, int(live * 1.3) + (4 << 20))))
    return r_tile, r_pad, hw_tile, hw_pad, lw, vmem_limit


# ------------------------------ wrapper ------------------------------------


@functools.partial(jax.jit, static_argnames=("relu",))
def batchnorm_relu(x_nchw, gamma, beta, *, relu: bool = True):
    """BatchNorm2d (training-mode batch statistics) + optional ReLU.

    x_nchw: (N, C, H, W) float; gamma, beta: (C,) float.
    """
    N, C, H, W = x_nchw.shape
    HW = H * W
    R = N * C
    count = N * HW

    # Free view: NCHW -> (N*C, H*W).  H*W on lanes; N folded into sublanes so
    # small-C layers do not waste (8,128) tile padding.
    x2 = x_nchw.reshape(R, HW)

    r_tile, r_pad, hw_tile, hw_pad, lw, vmem_limit = _plan_tiles(
        R, HW, x_nchw.dtype.itemsize)
    if r_pad > R or hw_pad > HW:
        # Awkward extents only.  Zero rows/lanes contribute nothing to the
        # sums (real `count` is used) and the padded output is sliced away.
        x2 = jnp.pad(x2, ((0, r_pad - R), (0, hw_pad - HW)))

    row_blocks = r_pad // r_tile
    hw_blocks = hw_pad // hw_tile

    # ---- pass 1: lane-wise per-row partial sum / sum-of-squares ----
    sums, sqs = pl.pallas_call(
        _stats_kernel,
        out_shape=(jax.ShapeDtypeStruct((r_pad, lw), jnp.float32),
                   jax.ShapeDtypeStruct((r_pad, lw), jnp.float32)),
        grid=(row_blocks, hw_blocks),
        in_specs=[pl.BlockSpec((r_tile, hw_tile), lambda r, h: (r, h))],
        out_specs=(pl.BlockSpec((r_tile, lw), lambda r, h: (r, 0)),
                   pl.BlockSpec((r_tile, lw), lambda r, h: (r, 0))),
        compiler_params=pltpu.CompilerParams(
            dimension_semantics=("parallel", "arbitrary"),
            vmem_limit_bytes=vmem_limit),
    )(x2)

    # ---- finalize stats + fold the affine (tiny O(N*C*128) XLA glue) ----
    row_sum = jnp.sum(sums[:R], axis=1)                 # (R,)
    row_sq = jnp.sum(sqs[:R], axis=1)                   # (R,)
    ch_sum = row_sum.reshape(N, C).sum(axis=0)          # (C,)
    ch_sq = row_sq.reshape(N, C).sum(axis=0)            # (C,)
    mean = ch_sum / count
    var = jnp.maximum(ch_sq / count - mean * mean, 0.0)  # biased variance
    inv = jax.lax.rsqrt(var + EPS)
    scale_c = gamma.astype(jnp.float32) * inv
    shift_c = beta.astype(jnp.float32) - mean * scale_c
    scale_r = jnp.tile(scale_c, N)                       # row r = n*C + c -> c
    shift_r = jnp.tile(shift_c, N)
    if r_pad > R:
        scale_r = jnp.pad(scale_r, (0, r_pad - R))
        shift_r = jnp.pad(shift_r, (0, r_pad - R))
    scale_r = scale_r.reshape(r_pad, 1)
    shift_r = shift_r.reshape(r_pad, 1)

    # ---- pass 2: fused scale/shift (+ ReLU) elementwise hot path ----
    out2 = pl.pallas_call(
        _make_norm_kernel(relu),
        out_shape=jax.ShapeDtypeStruct((r_pad, hw_pad), x_nchw.dtype),
        grid=(row_blocks, hw_blocks),
        in_specs=[pl.BlockSpec((r_tile, hw_tile), lambda r, h: (r, h)),
                  pl.BlockSpec((r_tile, 1), lambda r, h: (r, 0)),
                  pl.BlockSpec((r_tile, 1), lambda r, h: (r, 0))],
        out_specs=pl.BlockSpec((r_tile, hw_tile), lambda r, h: (r, h)),
        compiler_params=pltpu.CompilerParams(
            dimension_semantics=("parallel", "parallel"),
            vmem_limit_bytes=vmem_limit),
    )(x2, scale_r, shift_r)

    if r_pad > R or hw_pad > HW:
        out2 = out2[:R, :HW]
    return out2.reshape(N, C, H, W)


# ------------------------------- test ---------------------------------------


def _reference(x, gamma, beta, relu):
    C = x.shape[1]
    mean = jnp.mean(x, axis=(0, 2, 3), keepdims=True)
    var = jnp.var(x, axis=(0, 2, 3), keepdims=True)
    y = (x - mean) / jnp.sqrt(var + EPS)
    y = y * gamma.reshape(1, C, 1, 1) + beta.reshape(1, C, 1, 1)
    return jnp.maximum(y, 0.0) if relu else y


if __name__ == "__main__":
    key = jax.random.PRNGKey(0)

    cases = [
        ((2, 4, 16, 16), True),    # aligned HW, multi-step lane-wise reduction
        ((2, 4, 16, 16), False),   # Identity (relu=False) path of the module
        ((2, 3, 10, 20), True),    # small C (< 8 sublanes) + padded-HW path
        ((4, 8, 32, 32), True),    # paired lane-block accumulation, >1 row block
        ((4, 16, 12, 18), True),   # full-extent non-128-multiple hw_tile (tail)
    ]
    for i, (shape, relu) in enumerate(cases):
        kx, kg, kb, key = jax.random.split(key, 4)
        N, C, H, W = shape
        x = jax.random.normal(kx, shape, dtype=jnp.float32) * 3.0 + 1.5
        gamma = jax.random.normal(kg, (C,), dtype=jnp.float32) * 0.5 + 1.0
        beta = jax.random.normal(kb, (C,), dtype=jnp.float32) * 0.5

        out = jax.block_until_ready(batchnorm_relu(x, gamma, beta, relu=relu))
        ref = _reference(x, gamma, beta, relu)
        assert out.shape == shape
        err = float(jnp.max(jnp.abs(out - ref)))
        assert err < 3e-4, f"case {i} {shape} relu={relu}: max abs err {err}"

    print("KERNEL_OK")
</pallas_src>

<mosaic_0001>
module attributes {stable_mosaic.version = 11 : i64} {
  func.func @_stats_kernel(%arg0: i32, %arg1: i32, %arg2: memref<8x128xf32, #tpu.memory_space<vmem>>, %arg3: memref<8x128xf32, #tpu.memory_space<vmem>>, %arg4: memref<8x128xf32, #tpu.memory_space<vmem>>) attributes {dimension_semantics = [#tpu.dimension_semantics<parallel>, #tpu.dimension_semantics<arbitrary>], iteration_bounds = array<i64: 1, 2>, scalar_prefetch = 0 : i64, scratch_operands = 0 : i64, tpu.core_type = #tpu.core_type<tc>, window_params = [{transform_indices = @transform_0, window_bounds = array<i64: 8, 128>}, {transform_indices = @transform_1, window_bounds = array<i64: 8, 128>}, {transform_indices = @transform_2, window_bounds = array<i64: 8, 128>}]} {
    %c0_i32 = arith.constant 0 : i32
    %0 = arith.cmpi eq, %arg1, %c0_i32 : i32
    %1 = arith.extui %0 : i1 to i32
    %c0_i32_0 = arith.constant 0 : i32
    %2 = arith.cmpi ne, %1, %c0_i32_0 : i32
    scf.if %2 {
      %cst = arith.constant 0.000000e+00 : f32
      %11 = vector.broadcast %cst : f32 to vector<8x128xf32>
      %c0_10 = arith.constant 0 : index
      %c0_11 = arith.constant 0 : index
      %12 = vector.load %arg3[%c0_10, %c0_11] : memref<8x128xf32, #tpu.memory_space<vmem>>, vector<8x128xf32>
      tpu.vector_store %arg3[%c0_10, %c0_11], %11 {strides = array<i32>} : memref<8x128xf32, #tpu.memory_space<vmem>>, vector<8x128xf32>,
      %cst_12 = arith.constant 0.000000e+00 : f32
      %13 = vector.broadcast %cst_12 : f32 to vector<8x128xf32>
      %c0_13 = arith.constant 0 : index
      %c0_14 = arith.constant 0 : index
      %14 = vector.load %arg4[%c0_13, %c0_14] : memref<8x128xf32, #tpu.memory_space<vmem>>, vector<8x128xf32>
      tpu.vector_store %arg4[%c0_13, %c0_14], %13 {strides = array<i32>} : memref<8x128xf32, #tpu.memory_space<vmem>>, vector<8x128xf32>,
    } else {
    }
    %c0 = arith.constant 0 : index
    %c0_1 = arith.constant 0 : index
    %3 = vector.load %arg2[%c0, %c0_1] : memref<8x128xf32, #tpu.memory_space<vmem>>, vector<8x128xf32>
    %c0_2 = arith.constant 0 : index
    %c0_3 = arith.constant 0 : index
    %4 = vector.load %arg3[%c0_2, %c0_3] : memref<8x128xf32, #tpu.memory_space<vmem>>, vector<8x128xf32>
    %5 = arith.addf %4, %3 : vector<8x128xf32>
    %c0_4 = arith.constant 0 : index
    %c0_5 = arith.constant 0 : index
    %6 = vector.load %arg3[%c0_4, %c0_5] : memref<8x128xf32, #tpu.memory_space<vmem>>, vector<8x128xf32>
    tpu.vector_store %arg3[%c0_4, %c0_5], %5 {strides = array<i32>} : memref<8x128xf32, #tpu.memory_space<vmem>>, vector<8x128xf32>,
    %c0_6 = arith.constant 0 : index
    %c0_7 = arith.constant 0 : index
    %7 = vector.load %arg4[%c0_6, %c0_7] : memref<8x128xf32, #tpu.memory_space<vmem>>, vector<8x128xf32>
    %8 = arith.mulf %3, %3 : vector<8x128xf32>
    %9 = arith.addf %7, %8 : vector<8x128xf32>
    %c0_8 = arith.constant 0 : index
    %c0_9 = arith.constant 0 : index
    %10 = vector.load %arg4[%c0_8, %c0_9] : memref<8x128xf32, #tpu.memory_space<vmem>>, vector<8x128xf32>
    tpu.vector_store %arg4[%c0_8, %c0_9], %9 {strides = array<i32>} : memref<8x128xf32, #tpu.memory_space<vmem>>, vector<8x128xf32>,
    return
  }
  func.func @transform_0(%arg0: i32, %arg1: i32) -> (i32, i32) {
    %c0_i32 = arith.constant 0 : i32
    return %arg0, %arg1 : i32, i32
  }
  func.func @transform_1(%arg0: i32, %arg1: i32) -> (i32, i32) {
    %c0_i32 = arith.constant 0 : i32
    %c0_i32_0 = arith.constant 0 : i32
    return %arg0, %c0_i32 : i32, i32
  }
  func.func @transform_2(%arg0: i32, %arg1: i32) -> (i32, i32) {
    %c0_i32 = arith.constant 0 : i32
    %c0_i32_0 = arith.constant 0 : i32
    return %arg0, %c0_i32 : i32, i32
  }
}

module attributes {stable_mosaic.version = 11 : i64} {
  func.func @_norm_kernel(%arg0: i32, %arg1: i32, %arg2: memref<8x128xf32, #tpu.memory_space<vmem>>, %arg3: memref<8x1xf32, #tpu.memory_space<vmem>>, %arg4: memref<8x1xf32, #tpu.memory_space<vmem>>, %arg5: memref<8x128xf32, #tpu.memory_space<vmem>>) attributes {dimension_semantics = [#tpu.dimension_semantics<parallel>, #tpu.dimension_semantics<parallel>], iteration_bounds = array<i64: 1, 2>, scalar_prefetch = 0 : i64, scratch_operands = 0 : i64, tpu.core_type = #tpu.core_type<tc>, window_params = [{transform_indices = @transform_0, window_bounds = array<i64: 8, 128>}, {transform_indices = @transform_1, window_bounds = array<i64: 8, 1>}, {transform_indices = @transform_2, window_bounds = array<i64: 8, 1>}, {transform_indices = @transform_3, window_bounds = array<i64: 8, 128>}]} {
    %c0 = arith.constant 0 : index
    %c0_0 = arith.constant 0 : index
    %0 = vector.load %arg2[%c0, %c0_0] : memref<8x128xf32, #tpu.memory_space<vmem>>, vector<8x128xf32>
    %c0_1 = arith.constant 0 : index
    %c0_2 = arith.constant 0 : index
    %1 = vector.load %arg3[%c0_1, %c0_2] : memref<8x1xf32, #tpu.memory_space<vmem>>, vector<8x1xf32>
    %2 = vector.broadcast %1 : vector<8x1xf32> to vector<8x128xf32>
    %3 = arith.mulf %0, %2 : vector<8x128xf32>
    %c0_3 = arith.constant 0 : index
    %c0_4 = arith.constant 0 : index
    %4 = vector.load %arg4[%c0_3, %c0_4] : memref<8x1xf32, #tpu.memory_space<vmem>>, vector<8x1xf32>
    %5 = vector.broadcast %4 : vector<8x1xf32> to vector<8x128xf32>
    %6 = arith.addf %3, %5 : vector<8x128xf32>
    %cst = arith.constant 0.000000e+00 : f32
    %7 = vector.broadcast %cst : f32 to vector<8x128xf32>
    %8 = arith.maximumf %6, %7 : vector<8x128xf32>
    %c0_5 = arith.constant 0 : index
    %c0_6 = arith.constant 0 : index
    %9 = vector.load %arg5[%c0_5, %c0_6] : memref<8x128xf32, #tpu.memory_space<vmem>>, vector<8x128xf32>
    tpu.vector_store %arg5[%c0_5, %c0_6], %8 {strides = array<i32>} : memref<8x128xf32, #tpu.memory_space<vmem>>, vector<8x128xf32>,
    return
  }
  func.func @transform_0(%arg0: i32, %arg1: i32) -> (i32, i32) {
    %c0_i32 = arith.constant 0 : i32
    return %arg0, %arg1 : i32, i32
  }
  func.func @transform_1(%arg0: i32, %arg1: i32) -> (i32, i32) {
    %c0_i32 = arith.constant 0 : i32
    %c0_i32_0 = arith.constant 0 : i32
    return %arg0, %c0_i32 : i32, i32
  }
  func.func @transform_2(%arg0: i32, %arg1: i32) -> (i32, i32) {
    %c0_i32 = arith.constant 0 : i32
    %c0_i32_0 = arith.constant 0 : i32
    return %arg0, %c0_i32 : i32, i32
  }
  func.func @transform_3(%arg0: i32, %arg1: i32) -> (i32, i32) {
    %c0_i32 = arith.constant 0 : i32
    return %arg0, %arg1 : i32, i32
  }
}

</mosaic_0001>

<llo_original>
// kernel: tile.17
$region0: #{tile.17}
  #allocation0 [shape = 's32[1]{0}', space=sflag, size = 0x4, scoped, tag = 'scoped memory for tile.17']
  %s0 = inlined_call_operand.vmem [shape: f32[4], index: 0, kind: input, shape index: {}]
  %s1 = inlined_call_operand.vmem [shape: f32[2,4], index: 1, kind: output, shape index: {}]
  // Predicated region
  $region2: #{tile.17} parent=0 // pred_check
    _
  $region3: #{tile.17} parent=0 // pred_check_branch
    %3 = sbr.rel (0) target = $region5
  $region4: #{tile.17} parent=0 // pred_region
    _
  $region5: #{tile.17} parent=0 // pred_fallthru
    _
  %v4 = vld [vmem:[%s0] ss:$0 sm:$0xff]
  %5 = vst [vmem:[%s1] sm:$0x3] %v4

// kernel: tile.0
$region0: #{tile.0}
  %s0 = inlined_call_operand.vmem [shape: f32[2,4], index: 0, kind: input, shape index: {}]
  %s1 = inlined_call_operand.vmem [shape: f32[8,1], index: 1, kind: output, shape index: {}]
  $region1: #{tile.0} parent=0
    #allocation0 [shape = 'u8[4096]{0}', space=vmem, size = 0x1000, scoped, tag = 'scoped mem for input reshape']
    %s3 = ssub.s32 4, 1
    %v4 = vld [vmem:[%s0] sm:%s3]
    %5 = vst [vmem:[#allocation0] sm:%s3] %v4
    %v6 = vld [vmem:[#allocation0] sm:$0x3]
    %vm7 = vcmask 7168
    %8 = vst.msk [vmem:[%s1] ss:$4 sm:$0x3] %vm7, %v6
    %v9 = vld [vmem:[#allocation0] sm:$0x3]
    %10 = vrot.lane.b32.xlu0 %v9, 127
    %v11 = vpop.permute.xlu0 %10
    %vm12 = vcmask 7168
    %s13 = scalar_lea.vmem %s1, 1
    %14 = vst.msk [vmem:[%s13] ss:$4 sm:$0x3] %vm12, %v11
    %v15 = vld [vmem:[#allocation0] sm:$0x3]
    %16 = vrot.lane.b32.xlu0 %v15, 126
    %v17 = vpop.permute.xlu0 %16
    %vm18 = vcmask 7168
    %s19 = scalar_lea.vmem %s1, 2
    %20 = vst.msk [vmem:[%s19] ss:$4 sm:$0x3] %vm18, %v17
    %v21 = vld [vmem:[#allocation0] sm:$0x3]
    %22 = vrot.lane.b32.xlu0 %v21, 125
    %v23 = vpop.permute.xlu0 %22
    %vm24 = vcmask 7168
    %s25 = scalar_lea.vmem %s1, 3
    %26 = vst.msk [vmem:[%s25] ss:$4 sm:$0x3] %vm24, %v23

// kernel: batchnorm_relu.2
$region0: #{batchnorm_relu.2}
  #allocation0 [shape = 'u32[]', space=smem, size = 0x4, offset = 0x4, fixed_abs, tag = 'smem constant byte address 0x4 - core index']
  #allocation1 [shape = 'u32[72,128]{1,0:T(1,128)}', space=vmem, size = 0x9000, scoped, tag = 'internal scratch']
  %s0 = inlined_call_operand.vmem [shape: f32[8,256], index: 0, kind: input, shape index: {}]
  %s1 = inlined_call_operand.vmem [shape: f32[8,128], index: 1, kind: output, shape index: {0}]
  %s2 = inlined_call_operand.vmem [shape: f32[8,128], index: 2, kind: output, shape index: {1}]
  %3 = xla_tuple %s1, %s2
  %s4 = sld [smem:[#allocation0]]
  $region49: #{batchnorm_relu.2} parent=0
    _
  %s6 = ssub.s32 1, %s4
  %s7 = scalar_select 0, %s6, %s4
  loop: start=0, step=1, limit=4
  $region2: #{batchnorm_relu.2} parent=0 // loop_pre_header
    _
  $region3: #{batchnorm_relu.2} parent=0 // loop_header
    %s9 = sphi 0, %s13
    %p10 = scmp.ge.s32.totalorder %s9, 4
    %s16 = sphi 0, %s28
    %s17 = sphi 0, %s24
    %s18 = sphi 0, %s16
    %s19 = sphi 0, %s17
    %s20 = sphi 0, %s18
    %s21 = sphi 0, %s19
    %s33 = sphi 0, %s35
    %s36 = sphi 0, %s33
    %s37 = sphi 0, %s36
    %s53 = sphi 0, %s37
    %s59 = sphi 0, %s61
    %s62 = sphi 0, %s59
    %s63 = sphi 0, %s62
    %s79 = sphi 0, %s63
    %s85 = sphi 0, %s87
    %s88 = sphi 0, %s85
    %s89 = sphi 0, %s88
    %s105 = sphi 0, %s89
  $region4: #{batchnorm_relu.2} parent=0 // loop_header_branch
    %12 = sbr.rel (%p10) target = $region8
  $region5: #{batchnorm_relu.2} parent=0 // loop_body
    %s14 = ssub.s32 %s9, 1
    %s15 = ssub.s32 %s9, 2
    %s22 = sadd.s32 1, %s17
    %p23 = scmp.ge.s32.totalorder %s22, 2
    %s24 = scalar_select %p23, 0, %s22
    %s25 = sadd.s32 1, %s16
    %s26 = scalar_select %p23, %s25, %s16
    %p27 = scmp.ge.s32.totalorder %s26, 1
    %s28 = scalar_select %p27, 0, %s26
    %s29 = ssub.s32 %s16, %s28
    %s30 = ssub.s32 %s17, %s24
    %s31 = sor.u32 %s29, %s30
    %p32 = scmp.eq.s32.totalorder %s31, 0
    %s34 = sadd.s32 %s33, 1
    %s35 = scalar_select %p32, %s33, %s34
    %p38 = pneg %p32
    %p39 = scmp.eq.s32.totalorder %s9, 1
    %p40 = por %p38, %p39
    %p41 = scmp.ne.s32.totalorder %s33, %s36
    %p42 = scmp.eq.s32.totalorder %s9, 0
    %p43 = por %p41, %p42
    %p44 = scmp.ne.s32.totalorder %s33, %s36
    %p45 = scmp.eq.s32.totalorder %s14, 1
    %p46 = por %p44, %p45
    %p47 = scmp.ne.s32.totalorder %s36, %s37
    %p48 = scmp.eq.s32.totalorder %s14, 0
    %p49 = por %p47, %p48
    %p50 = scmp.ne.s32.totalorder %s36, %s37
    %p51 = scmp.eq.s32.totalorder %s15, 1
    %p52 = por %p50, %p51
    %p54 = scmp.ne.s32.totalorder %s37, %s53
    %p55 = scmp.eq.s32.totalorder %s15, 0
    %p56 = por %p54, %p55
    %s57 = ssub.s32 %s16, %s28
    %p58 = scmp.eq.s32.totalorder %s57, 0
    %s60 = sadd.s32 %s59, 1
    %s61 = scalar_select %p58, %s59, %s60
    %p64 = pneg %p58
    %p65 = scmp.eq.s32.totalorder %s9, 1
    %p66 = por %p64, %p65
    %p67 = scmp.ne.s32.totalorder %s59, %s62
    %p68 = scmp.eq.s32.totalorder %s9, 0
    %p69 = por %p67, %p68
    %p70 = scmp.ne.s32.totalorder %s59, %s62
    %p71 = scmp.eq.s32.totalorder %s14, 1
    %p72 = por %p70, %p71
    %p73 = scmp.ne.s32.totalorder %s62, %s63
    %p74 = scmp.eq.s32.totalorder %s14, 0
    %p75 = por %p73, %p74
    %p76 = scmp.ne.s32.totalorder %s62, %s63
    %p77 = scmp.eq.s32.totalorder %s15, 1
    %p78 = por %p76, %p77
    %p80 = scmp.ne.s32.totalorder %s63, %s79
    %p81 = scmp.eq.s32.totalorder %s15, 0
    %p82 = por %p80, %p81
    %s83 = ssub.s32 %s16, %s28
    %p84 = scmp.eq.s32.totalorder %s83, 0
    %s86 = sadd.s32 %s85, 1
    %s87 = scalar_select %p84, %s85, %s86
    %p90 = pneg %p84
    %p91 = scmp.eq.s32.totalorder %s9, 1
    %p92 = por %p90, %p91
    %p93 = scmp.ne.s32.totalorder %s85, %s88
    %p94 = scmp.eq.s32.totalorder %s9, 0
    %p95 = por %p93, %p94
    %p96 = scmp.ne.s32.totalorder %s85, %s88
    %p97 = scmp.eq.s32.totalorder %s14, 1
    %p98 = por %p96, %p97
    %p99 = scmp.ne.s32.totalorder %s88, %s89
    %p100 = scmp.eq.s32.totalorder %s14, 0
    %p101 = por %p99, %p100
    %p102 = scmp.ne.s32.totalorder %s88, %s89
    %p103 = scmp.eq.s32.totalorder %s15, 1
    %p104 = por %p102, %p103
    %p106 = scmp.ne.s32.totalorder %s89, %s105
    %p107 = scmp.eq.s32.totalorder %s15, 0
    %p108 = por %p106, %p107
    %p109 = scmp.le.s32.totalorder 1, %s9
    %p110 = scmp.lt.s32.totalorder %s9, 3
    %p111 = pnand %p109, %p110
    %p112 = pneg %p111
    // Predicated region
    $region9: #{batchnorm_relu.2} parent=5 // pred_check
      _
    $region10: #{batchnorm_relu.2} parent=5 // pred_check_branch
      %114 = sbr.rel (%p111) target = $region12
    $region11: #{batchnorm_relu.2} parent=5 // pred_region
      %s115 = ssub.s32 %s9, 1
    $region12: #{batchnorm_relu.2} parent=5 // pred_fallthru
      _
    %p116 = scmp.lt.s32.totalorder %s9, 2
    // Predicated region
    $region13: #{batchnorm_relu.2} parent=5 // pred_check
      %p117 = pneg %p116
    $region14: #{batchnorm_relu.2} parent=5 // pred_check_branch
      %119 = sbr.rel (%p117) target = $region16
    $region15: #{batchnorm_relu.2} parent=5 // pred_region
      // Predicated region
      $region17: #{batchnorm_relu.2} parent=15 // pred_check
        %p120 = pneg %p43
      $region18: #{batchnorm_relu.2} parent=15 // pred_check_branch
        %122 = sbr.rel (%p120) target = $region20
      $region19: #{batchnorm_relu.2} parent=15 // pred_region
        %p123 = scmp.lt.s32.totalorder %s16, 0
        %s124 = scalar_select %p123, %s16, 0
        %p125 = scmp.lt.s32.totalorder %s17, 1
        %s126 = scalar_select %p125, %s17, 1
        %s127 = smul.addr %s124, 2
        %s128 = sadd.s32 %s126, %s127
        %s129 = smul.addr %s128, 8
        %s130 = scalar_lea.vmem %s0, %s129
      $region20: #{batchnorm_relu.2} parent=15 // pred_fallthru
        _
    $region16: #{batchnorm_relu.2} parent=5 // pred_fallthru
      _
    %p131 = scmp.le.s32.totalorder 1, %s9
    %p132 = scmp.lt.s32.totalorder %s9, 3
    %p133 = pnand %p131, %p132
    %p134 = pneg %p133
    // Predicated region
    $region21: #{batchnorm_relu.2} parent=5 // pred_check
      _
    $region22: #{batchnorm_relu.2} parent=5 // pred_check_branch
      %136 = sbr.rel (%p133) target = $region24
    $region23: #{batchnorm_relu.2} parent=5 // pred_region
      %s137 = ssub.s32 %s9, 1
      %p138 = scmp.lt.s32.totalorder %s18, 0
      %s139 = scalar_select %p138, %s18, 0
      %p140 = scmp.lt.s32.totalorder %s19, 1
      %s141 = scalar_select %p140, %s19, 1
      %s142 = smul.addr %s139, 2
      %s143 = sadd.s32 %s141, %s142
      %s144 = smul.addr %s143, 8
      %s145 = scalar_lea.vmem %s0, %s144
      %p146 = pneg %p49
      %p147 = pneg %p46
      %p148 = pneg %p75
      %p149 = pneg %p72
      %p150 = scmp.lt.s32.totalorder %s18, 0
      %s151 = scalar_select %p150, %s18, 0
      %s152 = smul.addr %s151, 8
      %s153 = scalar_lea.vmem %s1, %s152
      %p154 = pneg %p101
      %p155 = pneg %p98
      %p156 = scmp.lt.s32.totalorder %s18, 0
      %s157 = scalar_select %p156, %s18, 0
      %s158 = smul.addr %s157, 8
      %s159 = scalar_lea.vmem %s2, %s158
      %p160 = scmp.lt.s32.totalorder %s18, 0
      %s161 = scalar_select %p160, %s18, 0
      %p162 = scmp.lt.s32.totalorder %s19, 1
      %s163 = scalar_select %p162, %s19, 1
      %s164 = smul.addr %s161, 2
      %s165 = sadd.s32 %s163, %s164
      %s166 = smul.addr %s165, 8
      %s167 = scalar_lea.vmem %s0, %s166
      %p168 = scmp.lt.s32.totalorder %s18, 0
      %s169 = scalar_select %p168, %s18, 0
      %s170 = smul.addr %s169, 8
      %s171 = scalar_lea.vmem %s1, %s170
      %p172 = scmp.lt.s32.totalorder %s18, 0
      %s173 = scalar_select %p172, %s18, 0
      %s174 = smul.addr %s173, 8
      %s175 = scalar_lea.vmem %s2, %s174
      %p176 = scmp.eq.s32.totalorder %s19, 0
      // Predicated region
      $region25: #{batchnorm_relu.2} parent=23 // pred_check
        %p177 = pneg %p176
      $region26: #{batchnorm_relu.2} parent=23 // pred_check_branch
        %179 = sbr.rel (%p177) target = $region28
      $region27: #{batchnorm_relu.2} parent=23 // pred_region
        %180 = vst [vmem:[%s171] sm:$0xff] 0.0
        %181 = vst [vmem:[%s175] sm:$0xff] 0.0
      $region28: #{batchnorm_relu.2} parent=23 // pred_fallthru
        _
      %v182 = vld [vmem:[%s167] sm:$0xff]
      %v183 = vld [vmem:[%s171] sm:$0xff]
      %v184 = vadd.f32 %v183, %v182
      %185 = vst [vmem:[%s171] sm:$0xff] %v184
      %v186 = vld [vmem:[%s175] sm:$0xff]
      %v187 = vmul.f32 %v182, %v182
      %v188 = vadd.f32 %v186, %v187
      %189 = vst [vmem:[%s175] sm:$0xff] %v188
      %p190 = scmp.lt.s32.totalorder %s18, 0
      %s191 = scalar_select %p190, %s18, 0
      %s192 = smul.addr %s191, 8
      %s193 = scalar_lea.vmem %s1, %s192
      %p194 = scmp.lt.s32.totalorder %s18, 0
      %s195 = scalar_select %p194, %s18, 0
      %s196 = smul.addr %s195, 8
      %s197 = scalar_lea.vmem %s2, %s196
      // Predicated region
      $region29: #{batchnorm_relu.2} parent=23 // pred_check
        %p198 = pneg %p72
      $region30: #{batchnorm_relu.2} parent=23 // pred_check_branch
        %200 = sbr.rel (%p198) target = $region32
      $region31: #{batchnorm_relu.2} parent=23 // pred_region
        _
      $region32: #{batchnorm_relu.2} parent=23 // pred_fallthru
        _
      // Predicated region
      $region33: #{batchnorm_relu.2} parent=23 // pred_check
        %p201 = pneg %p98
      $region34: #{batchnorm_relu.2} parent=23 // pred_check_branch
        %203 = sbr.rel (%p201) target = $region36
      $region35: #{batchnorm_relu.2} parent=23 // pred_region
        _
      $region36: #{batchnorm_relu.2} parent=23 // pred_fallthru
        _
      // Predicated region
      $region37: #{batchnorm_relu.2} parent=23 // pred_check
        %p204 = pneg %p72
      $region38: #{batchnorm_relu.2} parent=23 // pred_check_branch
        %206 = sbr.rel (%p204) target = $region40
      $region39: #{batchnorm_relu.2} parent=23 // pred_region
        %p207 = scmp.lt.s32.totalorder %s18, 0
        %s208 = scalar_select %p207, %s18, 0
        %s209 = smul.addr %s208, 8
        %s210 = scalar_lea.vmem %s1, %s209
      $region40: #{batchnorm_relu.2} parent=23 // pred_fallthru
        _
      // Predicated region
      $region41: #{batchnorm_relu.2} parent=23 // pred_check
        %p211 = pneg %p98
      $region42: #{batchnorm_relu.2} parent=23 // pred_check_branch
        %213 = sbr.rel (%p211) target = $region44
      $region43: #{batchnorm_relu.2} parent=23 // pred_region
        %p214 = scmp.lt.s32.totalorder %s18, 0
        %s215 = scalar_select %p214, %s18, 0
        %s216 = smul.addr %s215, 8
        %s217 = scalar_lea.vmem %s2, %s216
      $region44: #{batchnorm_relu.2} parent=23 // pred_fallthru
        _
    $region24: #{batchnorm_relu.2} parent=5 // pred_fallthru
      _
    %p218 = scmp.le.s32.totalorder 2, %s9
    // Predicated region
    $region45: #{batchnorm_relu.2} parent=5 // pred_check
      %p219 = pneg %p218
    $region46: #{batchnorm_relu.2} parent=5 // pred_check_branch
      %221 = sbr.rel (%p219) target = $region48
    $region47: #{batchnorm_relu.2} parent=5 // pred_region
      %s222 = ssub.s32 %s9, 2
    $region48: #{batchnorm_relu.2} parent=5 // pred_fallthru
      _
  $region6: #{batchnorm_relu.2} parent=0 // loop_footer
    %s13 = sadd.s32 1, %s9
  $region7: #{batchnorm_relu.2} parent=0 // loop_footer_branch
    %8 = sbr.rel target = $region3
  $region8: #{batchnorm_relu.2} parent=0 // loop_exit
    _

// kernel: batchnorm_relu.3
$region0: #{batchnorm_relu.3}
  #allocation0 [shape = 'u32[]', space=smem, size = 0x4, offset = 0x4, fixed_abs, tag = 'smem constant byte address 0x4 - core index']
  #allocation1 [shape = 'u32[72,128]{1,0:T(1,128)}', space=vmem, size = 0x9000, scoped, tag = 'internal scratch']
  %s0 = inlined_call_operand.vmem [shape: f32[8,256], index: 0, kind: input, shape index: {}]
  %s1 = inlined_call_operand.vmem [shape: f32[8,1], index: 1, kind: input, shape index: {}]
  %s2 = inlined_call_operand.vmem [shape: f32[8,1], index: 2, kind: input, shape index: {}]
  %s3 = inlined_call_operand.vmem [shape: f32[8,256], index: 3, kind: output, shape index: {}]
  %s4 = sld [smem:[#allocation0]]
  $region45: #{batchnorm_relu.3} parent=0
    _
  %s6 = ssub.s32 1, %s4
  %s7 = scalar_select 0, %s6, %s4
  loop: start=0, step=1, limit=4
  $region2: #{batchnorm_relu.3} parent=0 // loop_pre_header
    _
  $region3: #{batchnorm_relu.3} parent=0 // loop_header
    %s9 = sphi 0, %s13
    %p10 = scmp.ge.s32.totalorder %s9, 4
    %s16 = sphi 0, %s28
    %s17 = sphi 0, %s24
    %s18 = sphi 0, %s16
    %s19 = sphi 0, %s17
    %s20 = sphi 0, %s18
    %s21 = sphi 0, %s19
    %s33 = sphi 0, %s35
    %s36 = sphi 0, %s33
    %s37 = sphi 0, %s36
    %s53 = sphi 0, %s37
    %s59 = sphi 0, %s61
    %s62 = sphi 0, %s59
    %s63 = sphi 0, %s62
    %s79 = sphi 0, %s63
    %s85 = sphi 0, %s87
    %s88 = sphi 0, %s85
    %s89 = sphi 0, %s88
    %s105 = sphi 0, %s89
    %s113 = sphi 0, %s115
    %s116 = sphi 0, %s113
    %s117 = sphi 0, %s116
    %s133 = sphi 0, %s117
  $region4: #{batchnorm_relu.3} parent=0 // loop_header_branch
    %12 = sbr.rel (%p10) target = $region8
  $region5: #{batchnorm_relu.3} parent=0 // loop_body
    %s14 = ssub.s32 %s9, 1
    %s15 = ssub.s32 %s9, 2
    %s22 = sadd.s32 1, %s17
    %p23 = scmp.ge.s32.totalorder %s22, 2
    %s24 = scalar_select %p23, 0, %s22
    %s25 = sadd.s32 1, %s16
    %s26 = scalar_select %p23, %s25, %s16
    %p27 = scmp.ge.s32.totalorder %s26, 1
    %s28 = scalar_select %p27, 0, %s26
    %s29 = ssub.s32 %s16, %s28
    %s30 = ssub.s32 %s17, %s24
    %s31 = sor.u32 %s29, %s30
    %p32 = scmp.eq.s32.totalorder %s31, 0
    %s34 = sadd.s32 %s33, 1
    %s35 = scalar_select %p32, %s33, %s34
    %p38 = pneg %p32
    %p39 = scmp.eq.s32.totalorder %s9, 1
    %p40 = por %p38, %p39
    %p41 = scmp.ne.s32.totalorder %s33, %s36
    %p42 = scmp.eq.s32.totalorder %s9, 0
    %p43 = por %p41, %p42
    %p44 = scmp.ne.s32.totalorder %s33, %s36
    %p45 = scmp.eq.s32.totalorder %s14, 1
    %p46 = por %p44, %p45
    %p47 = scmp.ne.s32.totalorder %s36, %s37
    %p48 = scmp.eq.s32.totalorder %s14, 0
    %p49 = por %p47, %p48
    %p50 = scmp.ne.s32.totalorder %s36, %s37
    %p51 = scmp.eq.s32.totalorder %s15, 1
    %p52 = por %p50, %p51
    %p54 = scmp.ne.s32.totalorder %s37, %s53
    %p55 = scmp.eq.s32.totalorder %s15, 0
    %p56 = por %p54, %p55
    %s57 = ssub.s32 %s16, %s28
    %p58 = scmp.eq.s32.totalorder %s57, 0
    %s60 = sadd.s32 %s59, 1
    %s61 = scalar_select %p58, %s59, %s60
    %p64 = pneg %p58
    %p65 = scmp.eq.s32.totalorder %s9, 1
    %p66 = por %p64, %p65
    %p67 = scmp.ne.s32.totalorder %s59, %s62
    %p68 = scmp.eq.s32.totalorder %s9, 0
    %p69 = por %p67, %p68
    %p70 = scmp.ne.s32.totalorder %s59, %s62
    %p71 = scmp.eq.s32.totalorder %s14, 1
    %p72 = por %p70, %p71
    %p73 = scmp.ne.s32.totalorder %s62, %s63
    %p74 = scmp.eq.s32.totalorder %s14, 0
    %p75 = por %p73, %p74
    %p76 = scmp.ne.s32.totalorder %s62, %s63
    %p77 = scmp.eq.s32.totalorder %s15, 1
    %p78 = por %p76, %p77
    %p80 = scmp.ne.s32.totalorder %s63, %s79
    %p81 = scmp.eq.s32.totalorder %s15, 0
    %p82 = por %p80, %p81
    %s83 = ssub.s32 %s16, %s28
    %p84 = scmp.eq.s32.totalorder %s83, 0
    %s86 = sadd.s32 %s85, 1
    %s87 = scalar_select %p84, %s85, %s86
    %p90 = pneg %p84
    %p91 = scmp.eq.s32.totalorder %s9, 1
    %p92 = por %p90, %p91
    %p93 = scmp.ne.s32.totalorder %s85, %s88
    %p94 = scmp.eq.s32.totalorder %s9, 0
    %p95 = por %p93, %p94
    %p96 = scmp.ne.s32.totalorder %s85, %s88
    %p97 = scmp.eq.s32.totalorder %s14, 1
    %p98 = por %p96, %p97
    %p99 = scmp.ne.s32.totalorder %s88, %s89
    %p100 = scmp.eq.s32.totalorder %s14, 0
    %p101 = por %p99, %p100
    %p102 = scmp.ne.s32.totalorder %s88, %s89
    %p103 = scmp.eq.s32.totalorder %s15, 1
    %p104 = por %p102, %p103
    %p106 = scmp.ne.s32.totalorder %s89, %s105
    %p107 = scmp.eq.s32.totalorder %s15, 0
    %p108 = por %p106, %p107
    %s109 = ssub.s32 %s16, %s28
    %s110 = ssub.s32 %s17, %s24
    %s111 = sor.u32 %s109, %s110
    %p112 = scmp.eq.s32.totalorder %s111, 0
    %s114 = sadd.s32 %s113, 1
    %s115 = scalar_select %p112, %s113, %s114
    %p118 = pneg %p112
    %p119 = scmp.eq.s32.totalorder %s9, 1
    %p120 = por %p118, %p119
    %p121 = scmp.ne.s32.totalorder %s113, %s116
    %p122 = scmp.eq.s32.totalorder %s9, 0
    %p123 = por %p121, %p122
    %p124 = scmp.ne.s32.totalorder %s113, %s116
    %p125 = scmp.eq.s32.totalorder %s14, 1
    %p126 = por %p124, %p125
    %p127 = scmp.ne.s32.totalorder %s116, %s117
    %p128 = scmp.eq.s32.totalorder %s14, 0
    %p129 = por %p127, %p128
    %p130 = scmp.ne.s32.totalorder %s116, %s117
    %p131 = scmp.eq.s32.totalorder %s15, 1
    %p132 = por %p130, %p131
    %p134 = scmp.ne.s32.totalorder %s117, %s133
    %p135 = scmp.eq.s32.totalorder %s15, 0
    %p136 = por %p134, %p135
    %p137 = scmp.le.s32.totalorder 1, %s9
    %p138 = scmp.lt.s32.totalorder %s9, 3
    %p139 = pnand %p137, %p138
    %p140 = pneg %p139
    // Predicated region
    $region9: #{batchnorm_relu.3} parent=5 // pred_check
      _
    $region10: #{batchnorm_relu.3} parent=5 // pred_check_branch
      %142 = sbr.rel (%p139) target = $region12
    $region11: #{batchnorm_relu.3} parent=5 // pred_region
      %s143 = ssub.s32 %s9, 1
      // Predicated region
      $region13: #{batchnorm_relu.3} parent=11 // pred_check
        %p144 = pneg %p75
      $region14: #{batchnorm_relu.3} parent=11 // pred_check_branch
        %146 = sbr.rel (%p144) target = $region16
      $region15: #{batchnorm_relu.3} parent=11 // pred_region
        %p147 = scmp.lt.s32.totalorder %s18, 0
        %s148 = scalar_select %p147, %s18, 0
        %s149 = smul.addr %s148, 8
        %s150 = scalar_lea.vmem %s1, %s149
      $region16: #{batchnorm_relu.3} parent=11 // pred_fallthru
        _
      // Predicated region
      $region17: #{batchnorm_relu.3} parent=11 // pred_check
        %p151 = pneg %p101
      $region18: #{batchnorm_relu.3} parent=11 // pred_check_branch
        %153 = sbr.rel (%p151) target = $region20
      $region19: #{batchnorm_relu.3} parent=11 // pred_region
        %p154 = scmp.lt.s32.totalorder %s18, 0
        %s155 = scalar_select %p154, %s18, 0
        %s156 = smul.addr %s155, 8
        %s157 = scalar_lea.vmem %s2, %s156
      $region20: #{batchnorm_relu.3} parent=11 // pred_fallthru
        _
    $region12: #{batchnorm_relu.3} parent=5 // pred_fallthru
      _
    %p158 = scmp.lt.s32.totalorder %s9, 2
    // Predicated region
    $region21: #{batchnorm_relu.3} parent=5 // pred_check
      %p159 = pneg %p158
    $region22: #{batchnorm_relu.3} parent=5 // pred_check_branch
      %161 = sbr.rel (%p159) target = $region24
    $region23: #{batchnorm_relu.3} parent=5 // pred_region
      // Predicated region
      $region25: #{batchnorm_relu.3} parent=23 // pred_check
        %p162 = pneg %p43
      $region26: #{batchnorm_relu.3} parent=23 // pred_check_branch
        %164 = sbr.rel (%p162) target = $region28
      $region27: #{batchnorm_relu.3} parent=23 // pred_region
        %p165 = scmp.lt.s32.totalorder %s16, 0
        %s166 = scalar_select %p165, %s16, 0
        %p167 = scmp.lt.s32.totalorder %s17, 1
        %s168 = scalar_select %p167, %s17, 1
        %s169 = smul.addr %s166, 2
        %s170 = sadd.s32 %s168, %s169
        %s171 = smul.addr %s170, 8
        %s172 = scalar_lea.vmem %s0, %s171
      $region28: #{batchnorm_relu.3} parent=23 // pred_fallthru
        _
    $region24: #{batchnorm_relu.3} parent=5 // pred_fallthru
      _
    %p173 = scmp.le.s32.totalorder 1, %s9
    %p174 = scmp.lt.s32.totalorder %s9, 3
    %p175 = pnand %p173, %p174
    %p176 = pneg %p175
    // Predicated region
    $region29: #{batchnorm_relu.3} parent=5 // pred_check
      _
    $region30: #{batchnorm_relu.3} parent=5 // pred_check_branch
      %178 = sbr.rel (%p175) target = $region32
    $region31: #{batchnorm_relu.3} parent=5 // pred_region
      %s179 = ssub.s32 %s9, 1
      %p180 = scmp.lt.s32.totalorder %s18, 0
      %s181 = scalar_select %p180, %s18, 0
      %p182 = scmp.lt.s32.totalorder %s19, 1
      %s183 = scalar_select %p182, %s19, 1
      %s184 = smul.addr %s181, 2
      %s185 = sadd.s32 %s183, %s184
      %s186 = smul.addr %s185, 8
      %s187 = scalar_lea.vmem %s0, %s186
      %p188 = pneg %p49
      %p189 = pneg %p46
      %p190 = scmp.lt.s32.totalorder %s18, 0
      %s191 = scalar_select %p190, %s18, 0
      %s192 = smul.addr %s191, 8
      %s193 = scalar_lea.vmem %s1, %s192
      %p194 = pneg %p75
      %p195 = pneg %p72
      %p196 = scmp.lt.s32.totalorder %s18, 0
      %s197 = scalar_select %p196, %s18, 0
      %s198 = smul.addr %s197, 8
      %s199 = scalar_lea.vmem %s2, %s198
      %p200 = pneg %p101
      %p201 = pneg %p98
      %p202 = pneg %p129
      %p203 = pneg %p126
      %p204 = scmp.lt.s32.totalorder %s18, 0
      %s205 = scalar_select %p204, %s18, 0
      %p206 = scmp.lt.s32.totalorder %s19, 1
      %s207 = scalar_select %p206, %s19, 1
      %s208 = smul.addr %s205, 2
      %s209 = sadd.s32 %s207, %s208
      %s210 = smul.addr %s209, 8
      %s211 = scalar_lea.vmem %s3, %s210
      %p212 = scmp.lt.s32.totalorder %s18, 0
      %s213 = scalar_select %p212, %s18, 0
      %p214 = scmp.lt.s32.totalorder %s19, 1
      %s215 = scalar_select %p214, %s19, 1
      %s216 = smul.addr %s213, 2
      %s217 = sadd.s32 %s215, %s216
      %s218 = smul.addr %s217, 8
      %s219 = scalar_lea.vmem %s0, %s218
      %p220 = scmp.lt.s32.totalorder %s18, 0
      %s221 = scalar_select %p220, %s18, 0
      %s222 = smul.addr %s221, 8
      %s223 = scalar_lea.vmem %s1, %s222
      %p224 = scmp.lt.s32.totalorder %s18, 0
      %s225 = scalar_select %p224, %s18, 0
      %s226 = smul.addr %s225, 8
      %s227 = scalar_lea.vmem %s2, %s226
      %p228 = scmp.lt.s32.totalorder %s18, 0
      %s229 = scalar_select %p228, %s18, 0
      %p230 = scmp.lt.s32.totalorder %s19, 1
      %s231 = scalar_select %p230, %s19, 1
      %s232 = smul.addr %s229, 2
      %s233 = sadd.s32 %s231, %s232
      %s234 = smul.addr %s233, 8
      %s235 = scalar_lea.vmem %s3, %s234
      %v236 = vld [vmem:[%s219] sm:$0xff]
      %v237 = vld [vmem:[%s223] sm:$0xff]
      %239 = vset.pattern.permute.xlu0 0
      %240 = vperm.xlu0 %239, %v237
      %v241 = vpop.permute.xlu0 %240
      %v243 = vmul.f32 %v236, %v241
      %v244 = vld [vmem:[%s227] sm:$0xff]
      %246 = vset.pattern.permute.xlu0 0
      %247 = vperm.xlu0 %246, %v244
      %v248 = vpop.permute.xlu0 %247
      %v250 = vadd.f32 %v243, %v248
      %v251 = vmax.f32 %v250, 0.0
      %252 = vst [vmem:[%s235] sm:$0xff] %v251
      %p253 = scmp.lt.s32.totalorder %s18, 0
      %s254 = scalar_select %p253, %s18, 0
      %p255 = scmp.lt.s32.totalorder %s19, 1
      %s256 = scalar_select %p255, %s19, 1
      %s257 = smul.addr %s254, 2
      %s258 = sadd.s32 %s256, %s257
      %s259 = smul.addr %s258, 8
      %s260 = scalar_lea.vmem %s3, %s259
      // Predicated region
      $region33: #{batchnorm_relu.3} parent=31 // pred_check
        %p261 = pneg %p126
      $region34: #{batchnorm_relu.3} parent=31 // pred_check_branch
        %263 = sbr.rel (%p261) target = $region36
      $region35: #{batchnorm_relu.3} parent=31 // pred_region
        _
      $region36: #{batchnorm_relu.3} parent=31 // pred_fallthru
        _
    $region32: #{batchnorm_relu.3} parent=5 // pred_fallthru
      _
    %p264 = scmp.le.s32.totalorder 2, %s9
    // Predicated region
    $region37: #{batchnorm_relu.3} parent=5 // pred_check
      %p265 = pneg %p264
    $region38: #{batchnorm_relu.3} parent=5 // pred_check_branch
      %267 = sbr.rel (%p265) target = $region40
    $region39: #{batchnorm_relu.3} parent=5 // pred_region
      %s268 = ssub.s32 %s9, 2
      // Predicated region
      $region41: #{batchnorm_relu.3} parent=39 // pred_check
        %p269 = pneg %p132
      $region42: #{batchnorm_relu.3} parent=39 // pred_check_branch
        %271 = sbr.rel (%p269) target = $region44
      $region43: #{batchnorm_relu.3} parent=39 // pred_region
        %p272 = scmp.lt.s32.totalorder %s20, 0
        %s273 = scalar_select %p272, %s20, 0
        %p274 = scmp.lt.s32.totalorder %s21, 1
        %s275 = scalar_select %p274, %s21, 1
        %s276 = smul.addr %s273, 2
        %s277 = sadd.s32 %s275, %s276
        %s278 = smul.addr %s277, 8
        %s279 = scalar_lea.vmem %s3, %s278
      $region44: #{batchnorm_relu.3} parent=39 // pred_fallthru
        _
    $region40: #{batchnorm_relu.3} parent=5 // pred_fallthru
      _
  $region6: #{batchnorm_relu.3} parent=0 // loop_footer
    %s13 = sadd.s32 1, %s9
  $region7: #{batchnorm_relu.3} parent=0 // loop_footer_branch
    %8 = sbr.rel target = $region3
  $region8: #{batchnorm_relu.3} parent=0 // loop_exit
    _

</llo_original>
